<compile_context>
chip_gen: v6e
topology: v6e:2x2x1
jax: 0.10.0
libtpu: 0.0.40
codegen_flags: <defaults>
</compile_context>

<pallas_src>
import jax
import jax.numpy as jnp
from jax.experimental import pallas as pl
from jax.experimental.pallas import tpu as pltpu


# Requested scoped VMEM for this call; kept <= v7x's 64 MiB physical VMEM and
# used as the single source of truth for tile budgeting.
_VMEM_LIMIT_BYTES = 32 << 20


def _round_up(x, m):
    return ((x + m - 1) // m) * m


def _num_tensorcores():
    """v7x packs 2 TensorCores per chip; v5e/v6e have 1."""
    try:
        kind = str(getattr(jax.devices()[0], "device_kind", "")).lower()
        if "v7" in kind:
            return 2
    except Exception:
        pass
    return 1


def _pick_tile_n(n, h, num_tcs, vmem_limit_bytes=_VMEM_LIMIT_BYTES):
    """Rows per grid step, budgeted against the VMEM limit actually requested.

    Per-row VMEM accounting (f32; streamed minor dims sublane-padded to 8):
      * double-buffered streamed blocks: boxes_T (4->8 sublanes), rot_proj_T
        (3->8), out (3->8)  -> 3 * 8 * 4 B * 2 buffers = 192 B / row
      * live (H, TILE_N) f32 temporaries: h1, h2 plus ~2H of partial products
        -> 4 * H * 4 B / row
    Plus the VMEM-resident (double-buffered) weight/bias blocks, charged once.
    """
    per_row = 2 * 3 * 8 * 4 + 4 * h * 4
    weight_bytes = 2 * 4 * (h * 4 + h + h * h + h + 3 * h + 3)
    budget = int(0.75 * vmem_limit_bytes) - weight_bytes
    max_rows = max(128, budget // per_row)
    tile = max(128, min(4096, (max_rows // 128) * 128))

    n_pad128 = _round_up(max(n, 1), 128)
    tile = min(tile, n_pad128)

    # v7x megacore: "parallel" only shards across the 2 TCs with >= 2 grid steps,
    # so split the ROI axis evenly.  On 1-TC chips keep one maximal tile.
    if num_tcs >= 2 and n_pad128 >= 256:
        half = pl.cdiv(n_pad128 // 128, 2) * 128
        tile = min(tile, half)
    return tile


def _trans_head_kernel(
    boxes_t_ref,   # (4, TILE_N)  f32   raw boxes, transposed: rows = x1,y1,x2,y2
    rotp_ref,      # (3, TILE_N)  f32   precomputed x_car_cls_rot @ wp_rot, transposed
    w1_ref,        # (H, 4)  f32   intrinsics-folded layer-1 weight (transposed)
    b1_ref,        # (H, 1)  f32   intrinsics-folded layer-1 bias
    w2_ref,        # (H, H)  f32   layer-2 weight (transposed)
    b2_ref,        # (H, 1)  f32
    wpm_ref,       # (3, H)  f32   predictor weight, MLP branch (transposed)
    bp_ref,        # (3, 1)  f32
    out_ref,       # (3, TILE_N) f32   trans_pred, transposed (lane-dense store)
):
    bt = boxes_t_ref[...]          # (4, TILE_N)
    w1 = w1_ref[...]               # (H, 4)

    # Layer 1: intrinsics math is folded into w1/b1, so this is just
    # h1_T = relu(W1' @ [x1;y1;x2;y2] + b1').  K=4 -> 4 broadcast FMAs (VPU),
    # avoiding a tiny MXU matmul.
    h1 = (w1[:, 0:1] * bt[0:1, :] + w1[:, 1:2] * bt[1:2, :]
          + w1[:, 2:3] * bt[2:3, :] + w1[:, 3:4] * bt[3:4, :]
          + b1_ref[...])
    h1 = jnp.maximum(h1, 0.0)      # (H, TILE_N)

    # Layer 2: (H,H) @ (H,TILE_N) on the MXU, lane-dense result.
    h2 = jnp.dot(w2_ref[...], h1, preferred_element_type=jnp.float32) + b2_ref[...]
    h2 = jnp.maximum(h2, 0.0)      # (H, TILE_N)

    # Predictor: MLP branch on the MXU; rot branch arrives precomputed (hoisted
    # to the producer / XLA) as a (3, TILE_N) partial sum.
    mlp = jnp.dot(wpm_ref[...], h2, preferred_element_type=jnp.float32)   # (3, TILE_N)
    out_ref[...] = (mlp + rotp_ref[...] + bp_ref[...]).astype(out_ref.dtype)


def _fold_intrinsics(w1, b1, camera_intrinsic, im_scale, bottom_half):
    """Fold bbox_transform_by_intrinsics into the first FC layer (host-side jnp).

    feat = [((x1+x2)/2-cx)/fx, ((y1+y2)/2-cy)/fy, (x2-x1)/fx, (y2-y1)/fy] / im_scale
    feat @ w1 + b1  ==  [x1,y1,x2,y2] @ w1' + b1'
    """
    intr = jnp.asarray(camera_intrinsic, jnp.float32)
    fx, fy, cx, cy = intr[0], intr[1], intr[2], intr[3]
    if bottom_half:            # cfg.INPUT.BOTTOM_HALF: intrinsic_vect[3] /= 2 (cy)
        cy = cy / 2.0
    s = jnp.asarray(im_scale, jnp.float32)
    ax = 1.0 / (fx * s)
    ay = 1.0 / (fy * s)
    w1 = jnp.asarray(w1, jnp.float32)
    b1 = jnp.asarray(b1, jnp.float32)
    w_x1 = 0.5 * ax * w1[0] - ax * w1[2]
    w_y1 = 0.5 * ay * w1[1] - ay * w1[3]
    w_x2 = 0.5 * ax * w1[0] + ax * w1[2]
    w_y2 = 0.5 * ay * w1[1] + ay * w1[3]
    w1p = jnp.stack([w_x1, w_y1, w_x2, w_y2], axis=0)        # (4, H) rows=x1,y1,x2,y2
    b1p = b1[0] - cx * ax * w1[0] - cy * ay * w1[1]          # (H,)
    return w1p, b1p


def roi_trans_head_forward(
    concat_boxes,      # (N, 4)  float32   proposal boxes (x1, y1, x2, y2)
    x_car_cls_rot,     # (N, C)  float32 or bfloat16  per-ROI car-cls/rot features
    params,            # dict of weights/biases (see make_params)
    camera_intrinsic,  # (fx, fy, cx, cy)
    im_scale=1.0,      # eval path uses 1.0
    bottom_half=False, # cfg.INPUT.BOTTOM_HALF (static)
    tile_n=None,
):
    n = concat_boxes.shape[0]
    h = params["w1"].shape[1]

    # --- host-side parameter prep (tiny jnp ops; intrinsics changes don't force
    # a Mosaic recompile) ---
    w1p, b1p = _fold_intrinsics(params["w1"], params["b1"],
                                camera_intrinsic, im_scale, bottom_half)
    w1_t = w1p.T.astype(jnp.float32)                            # (H, 4)
    b1_t = b1p.reshape(h, 1).astype(jnp.float32)                # (H, 1)
    w2_t = jnp.asarray(params["w2"], jnp.float32).T             # (H, H)
    b2_t = jnp.asarray(params["b2"], jnp.float32).T             # (H, 1)
    wpm_t = jnp.asarray(params["wp_mlp"], jnp.float32).T        # (3, H)
    bp_t = jnp.asarray(params["bp"], jnp.float32).T             # (3, 1)

    # Predictor rot branch hoisted out of the Pallas call (perf review): this
    # (N,C)@(C,3) matmul fuses with the producer of x_car_cls_rot under XLA and
    # removes the dominant (C bytes/ROI) DMA stream from the kernel; only the
    # (3, N_pad) partial sum is streamed in.  Exact f32 accumulation.
    # TODO(synk): fuse this projection (and ideally the whole head) into the
    # producing ROI-feature kernel while x_car_cls_rot is still VMEM-resident.
    rot_proj = jnp.dot(x_car_cls_rot.astype(jnp.float32),
                       jnp.asarray(params["wp_rot"], jnp.float32),
                       preferred_element_type=jnp.float32)      # (N, 3)

    num_tcs = _num_tensorcores()
    if tile_n is None:
        tile_n = _pick_tile_n(n, h, num_tcs)
    n_pad = _round_up(max(n, 1), tile_n)
    pad = n_pad - n

    # Ship both streamed arrays transposed (channels on sublanes, ROIs on lanes);
    # a single pad+transpose each on the host side, no zero-buffer + scatter.
    boxes_t = jnp.pad(concat_boxes.astype(jnp.float32), ((0, pad), (0, 0))).T  # (4, n_pad)
    rotp_t = jnp.pad(rot_proj, ((0, pad), (0, 0))).T                           # (3, n_pad)

    grid = (n_pad // tile_n,)

    cost = pl.CostEstimate(
        flops=int(2 * n_pad * (4 * h + h * h + 3 * h)),
        transcendentals=0,
        bytes_accessed=int(n_pad * (4 + 3 + 3) * 4
                           + 4 * (h * 4 + h + h * h + h + 3 * h + 3)),
    )

    out_t = pl.pallas_call(
        _trans_head_kernel,
        out_shape=jax.ShapeDtypeStruct((3, n_pad), jnp.float32),
        grid_spec=pltpu.PrefetchScalarGridSpec(
            num_scalar_prefetch=0,
            grid=grid,
            in_specs=[
                pl.BlockSpec((4, tile_n), lambda i: (0, i)),   # boxes_T: tiled over N
                pl.BlockSpec((3, tile_n), lambda i: (0, i)),   # rot partial sum: tiled over N
                pl.BlockSpec((h, 4), lambda i: (0, 0)),        # weights: VMEM-resident
                pl.BlockSpec((h, 1), lambda i: (0, 0)),
                pl.BlockSpec((h, h), lambda i: (0, 0)),
                pl.BlockSpec((h, 1), lambda i: (0, 0)),
                pl.BlockSpec((3, h), lambda i: (0, 0)),
                pl.BlockSpec((3, 1), lambda i: (0, 0)),
            ],
            out_specs=pl.BlockSpec((3, tile_n), lambda i: (0, i)),
        ),
        compiler_params=pltpu.CompilerParams(
            # ROI tiles are independent -> shard across both TCs on v7x (tile
            # selection guarantees >= 2 steps there); no-op on v5e/v6e (1 TC,
            # where we keep a single maximal tile).
            dimension_semantics=("parallel",),
            vmem_limit_bytes=_VMEM_LIMIT_BYTES,
        ),
        cost_estimate=cost,
    )(boxes_t, rotp_t, w1_t, b1_t, w2_t, b2_t, wpm_t, bp_t)

    # TODO(synk): post_processor attaches trans_pred as a field on the BoxList
    # proposals (pure bookkeeping); numerically the head output is trans_pred.
    return out_t[:, :n].T   # (N, 3)


def make_params(key, rot_dim, hidden_dim):
    ks = jax.random.split(key, 5)
    scale = 0.05
    return {
        "w1":     scale * jax.random.normal(ks[0], (4, hidden_dim), jnp.float32),
        "b1":     jnp.zeros((1, hidden_dim), jnp.float32),
        "w2":     scale * jax.random.normal(ks[1], (hidden_dim, hidden_dim), jnp.float32),
        "b2":     jnp.zeros((1, hidden_dim), jnp.float32),
        "wp_mlp": scale * jax.random.normal(ks[2], (hidden_dim, 3), jnp.float32),
        "wp_rot": scale * jax.random.normal(ks[3], (rot_dim, 3), jnp.float32),
        "bp":     scale * jax.random.normal(ks[4], (1, 3), jnp.float32),
    }


def _make_inputs(key, n, rot_dim):
    k_box, k_rot = jax.random.split(key, 2)
    xy1 = 200.0 * jax.random.uniform(k_box, (n, 2), jnp.float32)
    wh = 20.0 + 100.0 * jax.random.uniform(jax.random.fold_in(k_box, 1), (n, 2), jnp.float32)
    concat_boxes = jnp.concatenate([xy1, xy1 + wh], axis=1)
    x_car_cls_rot = jax.random.normal(k_rot, (n, rot_dim), jnp.float32)
    return concat_boxes, x_car_cls_rot


def _reference(boxes, rot, p, intr, im_scale, bottom_half=False):
    """Pure-JAX reference of the original (un-folded, un-transposed) math."""
    fx, fy, cxi, cyi = [jnp.float32(v) for v in intr]
    if bottom_half:
        cyi = cyi / 2.0
    px = (boxes[:, 0:1] + boxes[:, 2:3]) / 2
    py = (boxes[:, 1:2] + boxes[:, 3:4]) / 2
    pw = boxes[:, 2:3] - boxes[:, 0:1]
    ph = boxes[:, 3:4] - boxes[:, 1:2]
    px = (px - cxi) / fx
    py = (py - cyi) / fy
    pw = pw / fx
    ph = ph / fy
    feat = jnp.concatenate([px, py, pw, ph], axis=1) / jnp.float32(im_scale)
    hh = jax.nn.relu(feat @ p["w1"] + p["b1"])
    hh = jax.nn.relu(hh @ p["w2"] + p["b2"])
    return hh @ p["wp_mlp"] + rot @ p["wp_rot"] + p["bp"]


if __name__ == "__main__":
    key = jax.random.PRNGKey(0)
    k_in, k_par, k_big = jax.random.split(key, 3)

    N = 8          # number of ROIs (concat over proposals)
    ROT_DIM = 32   # x_car_cls_rot feature dim per ROI
    HIDDEN = 32    # MLP head dim

    concat_boxes, x_car_cls_rot = _make_inputs(k_in, N, ROT_DIM)
    params = make_params(k_par, ROT_DIM, HIDDEN)

    # cfg.MODEL.TRANS_HEAD.CAMERA_INTRINSIC = [fx, fy, cx, cy]
    camera_intrinsic = (721.5377, 721.5377, 609.5593, 172.854)

    # --- check 1: standard eval path ---
    trans_pred = roi_trans_head_forward(
        concat_boxes, x_car_cls_rot, params, camera_intrinsic,
        im_scale=1.0, bottom_half=False,
    )
    trans_pred = jax.block_until_ready(trans_pred)
    assert trans_pred.shape == (N, 3) and trans_pred.dtype == jnp.float32
    expected = _reference(concat_boxes, x_car_cls_rot, params, camera_intrinsic, 1.0)
    assert jnp.allclose(trans_pred, expected, atol=1e-4, rtol=1e-4), (
        jnp.max(jnp.abs(trans_pred - expected)))

    # --- check 2: cfg.INPUT.BOTTOM_HALF path (cy halved) ---
    trans_pred_bh = jax.block_until_ready(roi_trans_head_forward(
        concat_boxes, x_car_cls_rot, params, camera_intrinsic,
        im_scale=1.0, bottom_half=True))
    expected_bh = _reference(concat_boxes, x_car_cls_rot, params, camera_intrinsic,
                             1.0, bottom_half=True)
    assert jnp.allclose(trans_pred_bh, expected_bh, atol=1e-4, rtol=1e-4), (
        jnp.max(jnp.abs(trans_pred_bh - expected_bh)))

    # --- check 3: multi-step grid (forced tile_n=128) + non-multiple N padding ---
    N_BIG = 300
    boxes_big, rot_big = _make_inputs(k_big, N_BIG, ROT_DIM)
    trans_big = jax.block_until_ready(roi_trans_head_forward(
        boxes_big, rot_big, params, camera_intrinsic,
        im_scale=1.0, bottom_half=False, tile_n=128))
    expected_big = _reference(boxes_big, rot_big, params, camera_intrinsic, 1.0)
    assert trans_big.shape == (N_BIG, 3)
    assert jnp.allclose(trans_big, expected_big, atol=1e-4, rtol=1e-4), (
        jnp.max(jnp.abs(trans_big - expected_big)))

    print("KERNEL_OK")
</pallas_src>

<mosaic_0001>
module attributes {stable_mosaic.version = 11 : i64} {
  func.func @_trans_head_kernel(%arg0: i32, %arg1: memref<4x128xf32, #tpu.memory_space<vmem>>, %arg2: memref<3x128xf32, #tpu.memory_space<vmem>>, %arg3: memref<32x4xf32, #tpu.memory_space<vmem>>, %arg4: memref<32x1xf32, #tpu.memory_space<vmem>>, %arg5: memref<32x32xf32, #tpu.memory_space<vmem>>, %arg6: memref<32x1xf32, #tpu.memory_space<vmem>>, %arg7: memref<3x32xf32, #tpu.memory_space<vmem>>, %arg8: memref<3x1xf32, #tpu.memory_space<vmem>>, %arg9: memref<3x128xf32, #tpu.memory_space<vmem>>) attributes {dimension_semantics = [#tpu.dimension_semantics<parallel>], iteration_bounds = array<i64: 1>, scalar_prefetch = 0 : i64, scratch_operands = 0 : i64, tpu.core_type = #tpu.core_type<tc>, window_params = [{transform_indices = @transform_0, window_bounds = array<i64: 4, 128>}, {transform_indices = @transform_1, window_bounds = array<i64: 3, 128>}, {pipeline_mode = #tpu.pipeline_mode<synchronous>, transform_indices = @transform_2, window_bounds = array<i64: 32, 4>}, {pipeline_mode = #tpu.pipeline_mode<synchronous>, transform_indices = @transform_3, window_bounds = array<i64: 32, 1>}, {pipeline_mode = #tpu.pipeline_mode<synchronous>, transform_indices = @transform_4, window_bounds = array<i64: 32, 32>}, {pipeline_mode = #tpu.pipeline_mode<synchronous>, transform_indices = @transform_5, window_bounds = array<i64: 32, 1>}, {pipeline_mode = #tpu.pipeline_mode<synchronous>, transform_indices = @transform_6, window_bounds = array<i64: 3, 32>}, {pipeline_mode = #tpu.pipeline_mode<synchronous>, transform_indices = @transform_7, window_bounds = array<i64: 3, 1>}, {transform_indices = @transform_8, window_bounds = array<i64: 3, 128>}]} {
    %c0 = arith.constant 0 : index
    %c0_0 = arith.constant 0 : index
    %0 = vector.load %arg1[%c0, %c0_0] : memref<4x128xf32, #tpu.memory_space<vmem>>, vector<4x128xf32>
    %c0_1 = arith.constant 0 : index
    %c0_2 = arith.constant 0 : index
    %1 = vector.load %arg3[%c0_1, %c0_2] : memref<32x4xf32, #tpu.memory_space<vmem>>, vector<32x4xf32>
    %2 = vector.extract_strided_slice %1 {offsets = [0, 0], sizes = [32, 1], strides = [1, 1]} : vector<32x4xf32> to vector<32x1xf32>
    %3 = vector.extract_strided_slice %0 {offsets = [0, 0], sizes = [1, 128], strides = [1, 1]} : vector<4x128xf32> to vector<1x128xf32>
    %4 = vector.broadcast %2 : vector<32x1xf32> to vector<32x128xf32>
    %5 = vector.broadcast %3 : vector<1x128xf32> to vector<32x128xf32>
    %6 = arith.mulf %4, %5 : vector<32x128xf32>
    %7 = vector.extract_strided_slice %1 {offsets = [0, 1], sizes = [32, 1], strides = [1, 1]} : vector<32x4xf32> to vector<32x1xf32>
    %8 = vector.extract_strided_slice %0 {offsets = [1, 0], sizes = [1, 128], strides = [1, 1]} : vector<4x128xf32> to vector<1x128xf32>
    %9 = vector.broadcast %7 : vector<32x1xf32> to vector<32x128xf32>
    %10 = vector.broadcast %8 : vector<1x128xf32> to vector<32x128xf32>
    %11 = arith.mulf %9, %10 : vector<32x128xf32>
    %12 = arith.addf %6, %11 : vector<32x128xf32>
    %13 = vector.extract_strided_slice %1 {offsets = [0, 2], sizes = [32, 1], strides = [1, 1]} : vector<32x4xf32> to vector<32x1xf32>
    %14 = vector.extract_strided_slice %0 {offsets = [2, 0], sizes = [1, 128], strides = [1, 1]} : vector<4x128xf32> to vector<1x128xf32>
    %15 = vector.broadcast %13 : vector<32x1xf32> to vector<32x128xf32>
    %16 = vector.broadcast %14 : vector<1x128xf32> to vector<32x128xf32>
    %17 = arith.mulf %15, %16 : vector<32x128xf32>
    %18 = arith.addf %12, %17 : vector<32x128xf32>
    %19 = vector.extract_strided_slice %1 {offsets = [0, 3], sizes = [32, 1], strides = [1, 1]} : vector<32x4xf32> to vector<32x1xf32>
    %20 = vector.extract_strided_slice %0 {offsets = [3, 0], sizes = [1, 128], strides = [1, 1]} : vector<4x128xf32> to vector<1x128xf32>
    %21 = vector.broadcast %19 : vector<32x1xf32> to vector<32x128xf32>
    %22 = vector.broadcast %20 : vector<1x128xf32> to vector<32x128xf32>
    %23 = arith.mulf %21, %22 : vector<32x128xf32>
    %24 = arith.addf %18, %23 : vector<32x128xf32>
    %c0_3 = arith.constant 0 : index
    %c0_4 = arith.constant 0 : index
    %25 = vector.load %arg4[%c0_3, %c0_4] : memref<32x1xf32, #tpu.memory_space<vmem>>, vector<32x1xf32>
    %26 = vector.broadcast %25 : vector<32x1xf32> to vector<32x128xf32>
    %27 = arith.addf %24, %26 : vector<32x128xf32>
    %cst = arith.constant 0.000000e+00 : f32
    %28 = vector.broadcast %cst : f32 to vector<32x128xf32>
    %29 = arith.maximumf %27, %28 : vector<32x128xf32>
    %c0_5 = arith.constant 0 : index
    %c0_6 = arith.constant 0 : index
    %30 = vector.load %arg5[%c0_5, %c0_6] : memref<32x32xf32, #tpu.memory_space<vmem>>, vector<32x32xf32>
    %cst_7 = arith.constant dense<0.000000e+00> : vector<32x128xf32>
    %31 = tpu.matmul %30, %29, %cst_7 {dimension_numbers = #tpu.dot_dimension_numbers<[1], [0], [0], [1], [0, 0, 1, 1], [], []>} : vector<32x32xf32>, vector<32x128xf32>, vector<32x128xf32> -> vector<32x128xf32>
    %c0_8 = arith.constant 0 : index
    %c0_9 = arith.constant 0 : index
    %32 = vector.load %arg6[%c0_8, %c0_9] : memref<32x1xf32, #tpu.memory_space<vmem>>, vector<32x1xf32>
    %33 = vector.broadcast %32 : vector<32x1xf32> to vector<32x128xf32>
    %34 = arith.addf %31, %33 : vector<32x128xf32>
    %cst_10 = arith.constant 0.000000e+00 : f32
    %35 = vector.broadcast %cst_10 : f32 to vector<32x128xf32>
    %36 = arith.maximumf %34, %35 : vector<32x128xf32>
    %c0_11 = arith.constant 0 : index
    %c0_12 = arith.constant 0 : index
    %37 = vector.load %arg7[%c0_11, %c0_12] : memref<3x32xf32, #tpu.memory_space<vmem>>, vector<3x32xf32>
    %cst_13 = arith.constant dense<0.000000e+00> : vector<3x128xf32>
    %38 = tpu.matmul %37, %36, %cst_13 {dimension_numbers = #tpu.dot_dimension_numbers<[1], [0], [0], [1], [0, 0, 1, 1], [], []>} : vector<3x32xf32>, vector<32x128xf32>, vector<3x128xf32> -> vector<3x128xf32>
    %c0_14 = arith.constant 0 : index
    %c0_15 = arith.constant 0 : index
    %39 = vector.load %arg2[%c0_14, %c0_15] : memref<3x128xf32, #tpu.memory_space<vmem>>, vector<3x128xf32>
    %40 = arith.addf %38, %39 : vector<3x128xf32>
    %c0_16 = arith.constant 0 : index
    %c0_17 = arith.constant 0 : index
    %41 = vector.load %arg8[%c0_16, %c0_17] : memref<3x1xf32, #tpu.memory_space<vmem>>, vector<3x1xf32>
    %42 = vector.broadcast %41 : vector<3x1xf32> to vector<3x128xf32>
    %43 = arith.addf %40, %42 : vector<3x128xf32>
    %c0_18 = arith.constant 0 : index
    %c0_19 = arith.constant 0 : index
    %44 = vector.load %arg9[%c0_18, %c0_19] : memref<3x128xf32, #tpu.memory_space<vmem>>, vector<3x128xf32>
    tpu.vector_store %arg9[%c0_18, %c0_19], %43 {strides = array<i32>} : memref<3x128xf32, #tpu.memory_space<vmem>>, vector<3x128xf32>,
    return
  }
  func.func @transform_0(%arg0: i32) -> (i32, i32) {
    %c0_i32 = arith.constant 0 : i32
    %c0_i32_0 = arith.constant 0 : i32
    return %c0_i32, %arg0 : i32, i32
  }
  func.func @transform_1(%arg0: i32) -> (i32, i32) {
    %c0_i32 = arith.constant 0 : i32
    %c0_i32_0 = arith.constant 0 : i32
    return %c0_i32, %arg0 : i32, i32
  }
  func.func @transform_2(%arg0: i32) -> (i32, i32) {
    %c0_i32 = arith.constant 0 : i32
    %c0_i32_0 = arith.constant 0 : i32
    %c0_i32_1 = arith.constant 0 : i32
    return %c0_i32, %c0_i32_0 : i32, i32
  }
  func.func @transform_3(%arg0: i32) -> (i32, i32) {
    %c0_i32 = arith.constant 0 : i32
    %c0_i32_0 = arith.constant 0 : i32
    %c0_i32_1 = arith.constant 0 : i32
    return %c0_i32, %c0_i32_0 : i32, i32
  }
  func.func @transform_4(%arg0: i32) -> (i32, i32) {
    %c0_i32 = arith.constant 0 : i32
    %c0_i32_0 = arith.constant 0 : i32
    %c0_i32_1 = arith.constant 0 : i32
    return %c0_i32, %c0_i32_0 : i32, i32
  }
  func.func @transform_5(%arg0: i32) -> (i32, i32) {
    %c0_i32 = arith.constant 0 : i32
    %c0_i32_0 = arith.constant 0 : i32
    %c0_i32_1 = arith.constant 0 : i32
    return %c0_i32, %c0_i32_0 : i32, i32
  }
  func.func @transform_6(%arg0: i32) -> (i32, i32) {
    %c0_i32 = arith.constant 0 : i32
    %c0_i32_0 = arith.constant 0 : i32
    %c0_i32_1 = arith.constant 0 : i32
    return %c0_i32, %c0_i32_0 : i32, i32
  }
  func.func @transform_7(%arg0: i32) -> (i32, i32) {
    %c0_i32 = arith.constant 0 : i32
    %c0_i32_0 = arith.constant 0 : i32
    %c0_i32_1 = arith.constant 0 : i32
    return %c0_i32, %c0_i32_0 : i32, i32
  }
  func.func @transform_8(%arg0: i32) -> (i32, i32) {
    %c0_i32 = arith.constant 0 : i32
    %c0_i32_0 = arith.constant 0 : i32
    return %c0_i32, %arg0 : i32, i32
  }
}

</mosaic_0001>

<llo_original>
// kernel: tpu_custom_call.1
$region0: #{tpu_custom_call.1}
  #allocation0 [shape = 'u32[]', space=smem, size = 0x4, offset = 0x4, fixed_abs, tag = 'smem constant byte address 0x4 - core index']
  #allocation1 [shape = 'u32[144,128]{1,0:T(1,128)}', space=vmem, size = 0x12000, scoped, tag = 'internal scratch']
  %s0 = inlined_call_operand.vmem [shape: f32[4,128], index: 0, kind: input, shape index: {}]
  %s1 = inlined_call_operand.vmem [shape: f32[3,128], index: 1, kind: input, shape index: {}]
  %s2 = inlined_call_operand.vmem [shape: f32[32,4], index: 2, kind: input, shape index: {}]
  %s3 = inlined_call_operand.vmem [shape: f32[32,1], index: 3, kind: input, shape index: {}]
  %s4 = inlined_call_operand.vmem [shape: f32[32,32], index: 4, kind: input, shape index: {}]
  %s5 = inlined_call_operand.vmem [shape: f32[32,1], index: 5, kind: input, shape index: {}]
  %s6 = inlined_call_operand.vmem [shape: f32[3,32], index: 6, kind: input, shape index: {}]
  %s7 = inlined_call_operand.vmem [shape: f32[3,1], index: 7, kind: input, shape index: {}]
  %s8 = inlined_call_operand.hbm [shape: f32[3,128], index: 8, kind: output, shape index: {}]
  %s9 = sld [smem:[#allocation0]]
  $region42: #{tpu_custom_call.1} parent=0
    _
  %s11 = ssub.s32 1, %s9
  %s12 = scalar_select 0, %s11, %s9
  $region1: #{tpu_custom_call.1} parent=0
    #allocation2 [shape = 'u8[2048]{0}', space=vmem, size = 0x800, scoped, tag = 'output window, operand 0, single buffered']
    #allocation3 [shape = 's32[1]{0}', space=sflag, size = 0x4, scoped, tag = 'scoped memory for tpu_custom_call.1']
    %13 = vsyncpa [#allocation3], 0
    // Predicated region
    $region2: #{tpu_custom_call.1} parent=1 // pred_check
      _
    $region3: #{tpu_custom_call.1} parent=1 // pred_check_branch
      %15 = sbr.rel (0) target = $region5
    $region4: #{tpu_custom_call.1} parent=1 // pred_region
      _
    $region5: #{tpu_custom_call.1} parent=1 // pred_fallthru
      _
    // Predicated region
    $region6: #{tpu_custom_call.1} parent=1 // pred_check
      _
    $region7: #{tpu_custom_call.1} parent=1 // pred_check_branch
      %17 = sbr.rel (0) target = $region9
    $region8: #{tpu_custom_call.1} parent=1 // pred_region
      _
    $region9: #{tpu_custom_call.1} parent=1 // pred_fallthru
      _
    // Predicated region
    $region10: #{tpu_custom_call.1} parent=1 // pred_check
      _
    $region11: #{tpu_custom_call.1} parent=1 // pred_check_branch
      %19 = sbr.rel (0) target = $region13
    $region12: #{tpu_custom_call.1} parent=1 // pred_region
      _
    $region13: #{tpu_custom_call.1} parent=1 // pred_fallthru
      _
    // Predicated region
    $region14: #{tpu_custom_call.1} parent=1 // pred_check
      _
    $region15: #{tpu_custom_call.1} parent=1 // pred_check_branch
      %21 = sbr.rel (0) target = $region17
    $region16: #{tpu_custom_call.1} parent=1 // pred_region
      _
    $region17: #{tpu_custom_call.1} parent=1 // pred_fallthru
      _
    // Predicated region
    $region18: #{tpu_custom_call.1} parent=1 // pred_check
      _
    $region19: #{tpu_custom_call.1} parent=1 // pred_check_branch
      %23 = sbr.rel (0) target = $region21
    $region20: #{tpu_custom_call.1} parent=1 // pred_region
      _
    $region21: #{tpu_custom_call.1} parent=1 // pred_fallthru
      _
    // Predicated region
    $region22: #{tpu_custom_call.1} parent=1 // pred_check
      _
    $region23: #{tpu_custom_call.1} parent=1 // pred_check_branch
      %25 = sbr.rel (0) target = $region25
    $region24: #{tpu_custom_call.1} parent=1 // pred_region
      _
    $region25: #{tpu_custom_call.1} parent=1 // pred_fallthru
      _
    // Predicated region
    $region26: #{tpu_custom_call.1} parent=1 // pred_check
      _
    $region27: #{tpu_custom_call.1} parent=1 // pred_check_branch
      %27 = sbr.rel (0) target = $region29
    $region28: #{tpu_custom_call.1} parent=1 // pred_region
      _
    $region29: #{tpu_custom_call.1} parent=1 // pred_fallthru
      _
    // Predicated region
    $region30: #{tpu_custom_call.1} parent=1 // pred_check
      _
    $region31: #{tpu_custom_call.1} parent=1 // pred_check_branch
      %29 = sbr.rel (0) target = $region33
    $region32: #{tpu_custom_call.1} parent=1 // pred_region
      _
    $region33: #{tpu_custom_call.1} parent=1 // pred_fallthru
      _
    %v30 = vld [vmem:[%s0] sm:$0xf]
    %v31 = vld [vmem:[%s2] sm:$0xff]
    %v32 = vld [vmem:[%s2 + $0x8] sm:$0xff]
    %v33 = vld [vmem:[%s2 + $0x10] sm:$0xff]
    %v34 = vld [vmem:[%s2 + $0x18] sm:$0xff]
    %36 = vset.pattern.permute.xlu0 0
    %37 = vperm.xlu0 %36, %v31
    %v38 = vpop.permute.xlu0 %37
    %41 = vset.pattern.permute.xlu0 0
    %42 = vperm.xlu0 %41, %v32
    %v43 = vpop.permute.xlu0 %42
    %46 = vset.pattern.permute.xlu0 0
    %47 = vperm.xlu0 %46, %v33
    %v48 = vpop.permute.xlu0 %47
    %51 = vset.pattern.permute.xlu0 0
    %52 = vperm.xlu0 %51, %v34
    %v53 = vpop.permute.xlu0 %52
    %v55 = vlaneseq
    %v56 = vshrl.u32 %v55, 7
    %v57 = vsub.s32 0, %v56
    %v58 = vrot.slane %v30, %v57
    %v59 = vmul.f32 %v38, %v58
    %v60 = vmul.f32 %v43, %v58
    %v61 = vmul.f32 %v48, %v58
    %v62 = vmul.f32 %v53, %v58
    %63 = vset.pattern.permute.xlu0 1
    %64 = vperm.xlu0 %63, %v31
    %v65 = vpop.permute.xlu0 %64
    %67 = vset.pattern.permute.xlu0 1
    %68 = vperm.xlu0 %67, %v32
    %v69 = vpop.permute.xlu0 %68
    %71 = vset.pattern.permute.xlu0 1
    %72 = vperm.xlu0 %71, %v33
    %v73 = vpop.permute.xlu0 %72
    %75 = vset.pattern.permute.xlu0 1
    %76 = vperm.xlu0 %75, %v34
    %v77 = vpop.permute.xlu0 %76
    %v79 = vlaneseq
    %v80 = vshrl.u32 %v79, 7
    %v81 = vsub.s32 1, %v80
    %v82 = vrot.slane %v30, %v81
    %v83 = vmul.f32 %v65, %v82
    %v84 = vmul.f32 %v69, %v82
    %v85 = vmul.f32 %v73, %v82
    %v86 = vmul.f32 %v77, %v82
    %v87 = vadd.f32 %v59, %v83
    %v88 = vadd.f32 %v60, %v84
    %v89 = vadd.f32 %v61, %v85
    %v90 = vadd.f32 %v62, %v86
    %91 = vset.pattern.permute.xlu0 2
    %92 = vperm.xlu0 %91, %v31
    %v93 = vpop.permute.xlu0 %92
    %95 = vset.pattern.permute.xlu0 2
    %96 = vperm.xlu0 %95, %v32
    %v97 = vpop.permute.xlu0 %96
    %99 = vset.pattern.permute.xlu0 2
    %100 = vperm.xlu0 %99, %v33
    %v101 = vpop.permute.xlu0 %100
    %103 = vset.pattern.permute.xlu0 2
    %104 = vperm.xlu0 %103, %v34
    %v105 = vpop.permute.xlu0 %104
    %v107 = vlaneseq
    %v108 = vshrl.u32 %v107, 7
    %v109 = vsub.s32 2, %v108
    %v110 = vrot.slane %v30, %v109
    %v111 = vmul.f32 %v93, %v110
    %v112 = vmul.f32 %v97, %v110
    %v113 = vmul.f32 %v101, %v110
    %v114 = vmul.f32 %v105, %v110
    %v115 = vadd.f32 %v87, %v111
    %v116 = vadd.f32 %v88, %v112
    %v117 = vadd.f32 %v89, %v113
    %v118 = vadd.f32 %v90, %v114
    %119 = vset.pattern.permute.xlu0 3
    %120 = vperm.xlu0 %119, %v31
    %v121 = vpop.permute.xlu0 %120
    %123 = vset.pattern.permute.xlu0 3
    %124 = vperm.xlu0 %123, %v32
    %v125 = vpop.permute.xlu0 %124
    %127 = vset.pattern.permute.xlu0 3
    %128 = vperm.xlu0 %127, %v33
    %v129 = vpop.permute.xlu0 %128
    %131 = vset.pattern.permute.xlu0 3
    %132 = vperm.xlu0 %131, %v34
    %v133 = vpop.permute.xlu0 %132
    %v135 = vlaneseq
    %v136 = vshrl.u32 %v135, 7
    %v137 = vsub.s32 3, %v136
    %v138 = vrot.slane %v30, %v137
    %v139 = vmul.f32 %v121, %v138
    %v140 = vmul.f32 %v125, %v138
    %v141 = vmul.f32 %v129, %v138
    %v142 = vmul.f32 %v133, %v138
    %v143 = vadd.f32 %v115, %v139
    %v144 = vadd.f32 %v116, %v140
    %v145 = vadd.f32 %v117, %v141
    %v146 = vadd.f32 %v118, %v142
    %v147 = vld [vmem:[%s3] sm:$0xff]
    %v148 = vld [vmem:[%s3 + $0x8] sm:$0xff]
    %v149 = vld [vmem:[%s3 + $0x10] sm:$0xff]
    %v150 = vld [vmem:[%s3 + $0x18] sm:$0xff]
    %152 = vset.pattern.permute.xlu0 0
    %153 = vperm.xlu0 %152, %v147
    %v154 = vpop.permute.xlu0 %153
    %157 = vset.pattern.permute.xlu0 0
    %158 = vperm.xlu0 %157, %v148
    %v159 = vpop.permute.xlu0 %158
    %162 = vset.pattern.permute.xlu0 0
    %163 = vperm.xlu0 %162, %v149
    %v164 = vpop.permute.xlu0 %163
    %167 = vset.pattern.permute.xlu0 0
    %168 = vperm.xlu0 %167, %v150
    %v169 = vpop.permute.xlu0 %168
    %v171 = vadd.f32 %v143, %v154
    %v172 = vadd.f32 %v144, %v159
    %v173 = vadd.f32 %v145, %v164
    %v174 = vadd.f32 %v146, %v169
    %v175 = vmax.f32 %v171, 0.0
    %v176 = vmax.f32 %v172, 0.0
    %v177 = vmax.f32 %v173, 0.0
    %v178 = vmax.f32 %v174, 0.0
    %v179 = vld [vmem:[%s4] sm:$0xff]
    %v180 = vld [vmem:[%s4 + $0x8] sm:$0xff]
    %v181 = vld [vmem:[%s4 + $0x10] sm:$0xff]
    %v182 = vld [vmem:[%s4 + $0x18] sm:$0xff]
    %v183 = vld [vmem:[%s5] sm:$0xff]
    %v184 = vld [vmem:[%s5 + $0x8] sm:$0xff]
    %v185 = vld [vmem:[%s5 + $0x10] sm:$0xff]
    %v186 = vld [vmem:[%s5 + $0x18] sm:$0xff]
    %188 = vset.pattern.permute.xlu0 0
    %189 = vperm.xlu0 %188, %v183
    %v190 = vpop.permute.xlu0 %189
    %193 = vset.pattern.permute.xlu0 0
    %194 = vperm.xlu0 %193, %v184
    %v195 = vpop.permute.xlu0 %194
    %198 = vset.pattern.permute.xlu0 0
    %199 = vperm.xlu0 %198, %v185
    %v200 = vpop.permute.xlu0 %199
    %203 = vset.pattern.permute.xlu0 0
    %204 = vperm.xlu0 %203, %v186
    %v205 = vpop.permute.xlu0 %204
    %vm207 = vcmask 261120
    %v209 = vsel %vm207, %v179, 0
    %v212 = vsel %vm207, %v180, 0
    %v215 = vsel %vm207, %v181, 0
    %v218 = vsel %vm207, %v182, 0
    %220 = vmatprep.subr.mxu0 0.0
    %221 = vmatpush1.msra.mxu0 0.0
    %222 = vmatprep.subr.mxu0 0.0
    %223 = vmatpush1.msra.mxu0 0.0
    %224 = vmatprep.subr.mxu0 0.0
    %225 = vmatpush1.msra.mxu0 0.0
    %226 = vmatprep.subr.mxu0 0.0
    %227 = vmatpush1.msra.mxu0 0.0
    %228 = vmatprep.subr.mxu0 0.0
    %229 = vmatpush1.msra.mxu0 0.0
    %230 = vmatprep.subr.mxu0 0.0
    %231 = vmatpush1.msra.mxu0 0.0
    %232 = vmatprep.subr.mxu0 0.0
    %233 = vmatpush1.msra.mxu0 0.0
    %234 = vmatprep.subr.mxu0 0.0
    %235 = vmatpush1.msra.mxu0 0.0
    %236 = vmatprep.subr.mxu0 0.0
    %237 = vmatpush1.msra.mxu0 0.0
    %238 = vmatprep.subr.mxu0 0.0
    %239 = vmatpush1.msra.mxu0 0.0
    %240 = vmatprep.subr.mxu0 0.0
    %241 = vmatpush1.msra.mxu0 0.0
    %242 = vmatprep.subr.mxu0 0.0
    %243 = vmatpush1.msra.mxu0 0.0
    %244 = vmatprep.subr.mxu0 0.0
    %245 = vmatpush1.msra.mxu0 %v178
    %246 = vmatprep.subr.mxu0 0.0
    %247 = vmatpush1.msra.mxu0 %v177
    %248 = vmatprep.subr.mxu0 0.0
    %249 = vmatpush1.msra.mxu0 %v176
    %250 = vmatprep.subr.mxu0 0.0
    %251 = vmatpush1.msra.mxu0 %v175
    %252 = vmatprep.subr.mxu0 0.0
    %253 = vmatpush2.msra.mxu0 0.0
    %254 = vmatprep.subr.mxu0 0.0
    %255 = vmatpush2.msra.mxu0 0.0
    %256 = vmatprep.subr.mxu0 0.0
    %257 = vmatpush2.msra.mxu0 0.0
    %258 = vmatprep.subr.mxu0 0.0
    %259 = vmatpush2.msra.mxu0 0.0
    %260 = vmatprep.subr.mxu0 0.0
    %261 = vmatpush2.msra.mxu0 0.0
    %262 = vmatprep.subr.mxu0 0.0
    %263 = vmatpush2.msra.mxu0 0.0
    %264 = vmatprep.subr.mxu0 0.0
    %265 = vmatpush2.msra.mxu0 0.0
    %266 = vmatprep.subr.mxu0 0.0
    %267 = vmatpush2.msra.mxu0 0.0
    %268 = vmatprep.subr.mxu0 0.0
    %269 = vmatpush2.msra.mxu0 0.0
    %270 = vmatprep.subr.mxu0 0.0
    %271 = vmatpush2.msra.mxu0 0.0
    %272 = vmatprep.subr.mxu0 0.0
    %273 = vmatpush2.msra.mxu0 0.0
    %274 = vmatprep.subr.mxu0 0.0
    %275 = vmatpush2.msra.mxu0 0.0
    %276 = vmatprep.subr.mxu0 0.0
    %277 = vmatpush2.msra.mxu0 0.0
    %278 = vmatprep.subr.mxu0 0.0
    %279 = vmatpush2.msra.mxu0 0.0
    %280 = vmatprep.subr.mxu0 0.0
    %281 = vmatpush2.msra.mxu0 0.0
    %282 = vmatprep.subr.mxu0 0.0
    %283 = vmatpush2.msra.mxu0 0.0
    %284 = vmatprep.mubr.f32.mxu0 0.0
    %285 = vmatmul.mubr.f32.gmra.mxu0 %v209
    %v286 = vpop.f32.mrf.mxu0
    %v287 = vadd.f32 %v190, %v286
    %v288 = vpop.f32.mrf.mxu0
    %289 = vmatprep.mubr.f32.mxu0 0.0
    %290 = vmatmul.mubr.f32.gmra.mxu0 %v212
    %v291 = vpop.f32.mrf.mxu0
    %v292 = vadd.f32 %v195, %v291
    %v293 = vpop.f32.mrf.mxu0
    %294 = vmatprep.mubr.f32.mxu0 0.0
    %295 = vmatmul.mubr.f32.gmra.mxu0 %v215
    %v296 = vpop.f32.mrf.mxu0
    %v297 = vadd.f32 %v200, %v296
    %v298 = vpop.f32.mrf.mxu0
    %299 = vmatprep.mubr.f32.mxu0 0.0
    %300 = vmatmul.mubr.f32.gmra.mxu0 %v218
    %v301 = vpop.f32.mrf.mxu0
    %v302 = vadd.f32 %v205, %v301
    %v303 = vpop.f32.mrf.mxu0
    %304 = vdwg.mxu0
    %v305 = vmax.f32 %v287, 0.0
    %v306 = vmax.f32 %v292, 0.0
    %v307 = vmax.f32 %v297, 0.0
    %v308 = vmax.f32 %v302, 0.0
    %v309 = vld [vmem:[%s6] sm:$0x7]
    %v310 = vld [vmem:[%s1] sm:$0x7]
    %v312 = vsel %vm207, %v309, 0
    %314 = vmatprep.subr.mxu0 0.0
    %315 = vmatpush1.msra.mxu0 0.0
    %316 = vmatprep.subr.mxu0 0.0
    %317 = vmatpush1.msra.mxu0 0.0
    %318 = vmatprep.subr.mxu0 0.0
    %319 = vmatpush1.msra.mxu0 0.0
    %320 = vmatprep.subr.mxu0 0.0
    %321 = vmatpush1.msra.mxu0 0.0
    %322 = vmatprep.subr.mxu0 0.0
    %323 = vmatpush1.msra.mxu0 0.0
    %324 = vmatprep.subr.mxu0 0.0
    %325 = vmatpush1.msra.mxu0 0.0
    %326 = vmatprep.subr.mxu0 0.0
    %327 = vmatpush1.msra.mxu0 0.0
    %328 = vmatprep.subr.mxu0 0.0
    %329 = vmatpush1.msra.mxu0 0.0
    %330 = vmatprep.subr.mxu0 0.0
    %331 = vmatpush1.msra.mxu0 0.0
    %332 = vmatprep.subr.mxu0 0.0
    %333 = vmatpush1.msra.mxu0 0.0
    %334 = vmatprep.subr.mxu0 0.0
    %335 = vmatpush1.msra.mxu0 0.0
    %336 = vmatprep.subr.mxu0 0.0
    %337 = vmatpush1.msra.mxu0 0.0
    %338 = vmatprep.subr.mxu0 0.0
    %339 = vmatpush1.msra.mxu0 %v308
    %340 = vmatprep.subr.mxu0 0.0
    %341 = vmatpush1.msra.mxu0 %v307
    %342 = vmatprep.subr.mxu0 0.0
    %343 = vmatpush1.msra.mxu0 %v306
    %344 = vmatprep.subr.mxu0 0.0
    %345 = vmatpush1.msra.mxu0 %v305
    %346 = vmatprep.subr.mxu0 0.0
    %347 = vmatpush2.msra.mxu0 0.0
    %348 = vmatprep.subr.mxu0 0.0
    %349 = vmatpush2.msra.mxu0 0.0
    %350 = vmatprep.subr.mxu0 0.0
    %351 = vmatpush2.msra.mxu0 0.0
    %352 = vmatprep.subr.mxu0 0.0
    %353 = vmatpush2.msra.mxu0 0.0
    %354 = vmatprep.subr.mxu0 0.0
    %355 = vmatpush2.msra.mxu0 0.0
    %356 = vmatprep.subr.mxu0 0.0
    %357 = vmatpush2.msra.mxu0 0.0
    %358 = vmatprep.subr.mxu0 0.0
    %359 = vmatpush2.msra.mxu0 0.0
    %360 = vmatprep.subr.mxu0 0.0
    %361 = vmatpush2.msra.mxu0 0.0
    %362 = vmatprep.subr.mxu0 0.0
    %363 = vmatpush2.msra.mxu0 0.0
    %364 = vmatprep.subr.mxu0 0.0
    %365 = vmatpush2.msra.mxu0 0.0
    %366 = vmatprep.subr.mxu0 0.0
    %367 = vmatpush2.msra.mxu0 0.0
    %368 = vmatprep.subr.mxu0 0.0
    %369 = vmatpush2.msra.mxu0 0.0
    %370 = vmatprep.subr.mxu0 0.0
    %371 = vmatpush2.msra.mxu0 0.0
    %372 = vmatprep.subr.mxu0 0.0
    %373 = vmatpush2.msra.mxu0 0.0
    %374 = vmatprep.subr.mxu0 0.0
    %375 = vmatpush2.msra.mxu0 0.0
    %376 = vmatprep.subr.mxu0 0.0
    %377 = vmatpush2.msra.mxu0 0.0
    %378 = vmatprep.mubr.f32.mxu0 0.0
    %379 = vmatmul.mubr.f32.gmra.mxu0 %v312
    %v380 = vpop.f32.mrf.mxu0
    %v381 = vadd.f32 %v310, %v380
    %v382 = vpop.f32.mrf.mxu0
    %383 = vdwg.mxu0
    %v384 = vld [vmem:[%s7] sm:$0x7]
    %386 = vset.pattern.permute.xlu0 0
    %387 = vperm.xlu0 %386, %v384
    %v388 = vpop.permute.xlu0 %387
    %v390 = vadd.f32 %v381, %v388
    %391 = vst [vmem:[#allocation2] sm:$0x7] %v390
    // Predicated region
    $region34: #{tpu_custom_call.1} parent=1 // pred_check
      _
    $region35: #{tpu_custom_call.1} parent=1 // pred_check_branch
      %393 = sbr.rel (0) target = $region37
    $region36: #{tpu_custom_call.1} parent=1 // pred_region
      %s395 = ssub.s32 64, 64
      %396 = vsyncadd [#allocation3], %s395
      %s398 = sshll.u32 [#allocation2], 4
      %s399 = int_to_ptr.vmem [resolvable:$true] %s398
      %401 = dma.vmem_to_hbm [thread:$0]  %s399, 64, %s8, [#allocation3]
    $region37: #{tpu_custom_call.1} parent=1 // pred_fallthru
      _
    // Predicated region
    $region38: #{tpu_custom_call.1} parent=1 // pred_check
      _
    $region39: #{tpu_custom_call.1} parent=1 // pred_check_branch
      %403 = sbr.rel (0) target = $region41
    $region40: #{tpu_custom_call.1} parent=1 // pred_region
      %404 = dma.done [#allocation3], 64
    $region41: #{tpu_custom_call.1} parent=1 // pred_fallthru
      _
    %405 = vsyncpa [#allocation3], 1

</llo_original>
